<compile_context>
chip_gen: v7x
topology: tpu7x:2x2x1
jax: 0.10.0
libtpu: 0.0.40
codegen_flags: <defaults>
</compile_context>

<pallas_src>
import functools

import jax
import jax.numpy as jnp
from jax.experimental import pallas as pl
from jax.experimental.pallas import tpu as pltpu


def _encoder_sandwich_kernel(x_ref, topic_ref,
                             w1_ref, b1_ref,
                             wheads_ref, bheads_ref,
                             eps_ref,
                             out_ref,
                             *, img_h_dim, zd_dim):
    x = x_ref[...]            # (Np, Din)  bf16
    topic = topic_ref[...]    # (Np, T)    bf16

    # layer_img2h4zd: Linear + ReLU  (bf16 MXU matmul, f32 accumulation, f32 VPU relu)
    h = jnp.dot(x, w1_ref[...], preferred_element_type=jnp.float32) + b1_ref[...]
    h = jnp.maximum(h, 0.0)                       # (Np, img_h_dim) f32
    h_lo = h.astype(wheads_ref.dtype)             # bf16 operand for head matmul

    # encoder_cat_topic_img_h2zd (LSEncoderLinear), mu and sigma heads fused:
    # cat((h, topic), 1) @ [Wmu | Wsg]  ==  h @ W[:H] + topic @ W[H:]
    w_h = wheads_ref[:img_h_dim, :]               # (img_h_dim, 2*zd_dim) bf16
    w_t = wheads_ref[img_h_dim:, :]               # (T,         2*zd_dim) bf16
    raw2 = (jnp.dot(h_lo, w_h, preferred_element_type=jnp.float32)
            + jnp.dot(topic, w_t, preferred_element_type=jnp.float32)
            + bheads_ref[...])                    # (Np, 2*zd_dim) f32

    mu = raw2[:, :zd_dim]                                     # (Np, zd_dim)
    scale = jax.nn.softplus(raw2[:, zd_dim:]) + 1e-7          # positive std (EUP)

    # rsample(): reparameterization with externally supplied standard-normal noise
    z = mu + scale * eps_ref[...]

    # single lane-contiguous output slab: [mu | scale | z]
    out_ref[...] = jnp.concatenate([mu, scale, z], axis=1)    # (Np, 3*zd_dim)


def init_params(key, c, h, w, img_h_dim, num_topics, zd_dim):
    """Deterministic parameter init (PyTorch-nn.Linear-style uniform bounds).

    Head weights for the mu and sigma branches are packed once here into a single
    (img_h_dim + num_topics, 2*zd_dim) matrix and a (1, 2*zd_dim) bias, and the
    matmul operands are stored in bfloat16 (accumulation stays f32 in the kernel).
    """
    d_in = c * h * w
    ks = jax.random.split(key, 3)

    def lin(k, fan_in, fan_out):
        bound = 1.0 / jnp.sqrt(jnp.float32(fan_in))
        kw, kb = jax.random.split(k)
        w_ = jax.random.uniform(kw, (fan_in, fan_out), jnp.float32, -bound, bound)
        b_ = jax.random.uniform(kb, (1, fan_out), jnp.float32, -bound, bound)
        return w_, b_

    w1, b1 = lin(ks[0], d_in, img_h_dim)                       # img -> h_img
    wmu, bmu = lin(ks[1], img_h_dim + num_topics, zd_dim)      # mean head
    wsg, bsg = lin(ks[2], img_h_dim + num_topics, zd_dim)      # scale head

    wheads = jnp.concatenate([wmu, wsg], axis=1)               # (H+T, 2*zd_dim)
    bheads = jnp.concatenate([bmu, bsg], axis=1)               # (1,   2*zd_dim)
    return dict(
        w1=w1.astype(jnp.bfloat16),
        b1=b1.astype(jnp.float32),
        wheads=wheads.astype(jnp.bfloat16),
        bheads=bheads.astype(jnp.float32),
    )


def encoder_sandwich_forward(img, vec_topic, params, eps):
    """(img NCHW, topic (N,T)) -> ((mu, scale), zd_q). All compute runs in one Pallas kernel."""
    n = img.shape[0]
    img_h_dim = params["b1"].shape[-1]
    zd_dim = params["bheads"].shape[-1] // 2

    # glue: flatten NCHW and pad batch up to the f32 sublane height (multiple of 8)
    x = img.reshape(n, -1)
    n_pad = max(8, ((n + 7) // 8) * 8)
    pad = n_pad - n
    x = jnp.pad(x, ((0, pad), (0, 0))).astype(jnp.bfloat16)
    topic = jnp.pad(vec_topic, ((0, pad), (0, 0))).astype(jnp.bfloat16)
    eps_p = jnp.pad(eps, ((0, pad), (0, 0))).astype(jnp.float32)

    d_in = x.shape[1]
    num_topics = topic.shape[1]

    flops = 2 * n_pad * (d_in * img_h_dim + (img_h_dim + num_topics) * 2 * zd_dim)
    bytes_accessed = (x.size * 2 + topic.size * 2 + eps_p.size * 4
                      + params["w1"].size * 2 + params["b1"].size * 4
                      + params["wheads"].size * 2 + params["bheads"].size * 4
                      + n_pad * 3 * zd_dim * 4)
    cost = pl.CostEstimate(flops=flops,
                           transcendentals=n_pad * 2 * zd_dim,
                           bytes_accessed=bytes_accessed)

    vmem = pl.BlockSpec(memory_space=pltpu.MemorySpace.VMEM)
    out = pl.pallas_call(
        functools.partial(_encoder_sandwich_kernel,
                          img_h_dim=img_h_dim, zd_dim=zd_dim),
        out_shape=jax.ShapeDtypeStruct((n_pad, 3 * zd_dim), jnp.float32),
        in_specs=[vmem] * 7,
        out_specs=vmem,
        cost_estimate=cost,
    )(x, topic,
      params["w1"], params["b1"],
      params["wheads"], params["bheads"],
      eps_p)

    mu = out[:n, :zd_dim]
    scale = out[:n, zd_dim:2 * zd_dim]
    zd_q = out[:n, 2 * zd_dim:]

    q_zd = (mu, scale)   # Normal distribution parameters (loc, scale)
    return q_zd, zd_q


if __name__ == "__main__":
    # Small shapes consistent with the module: batch=2, C=4, 16x16 image,
    # num_topics=8, img_h_dim=32, zd_dim=16.
    N, C, H, W = 2, 4, 16, 16
    NUM_TOPICS, IMG_H_DIM, ZD_DIM = 8, 32, 16

    key = jax.random.PRNGKey(0)
    k_img, k_topic, k_eps, k_params = jax.random.split(key, 4)

    img = jax.random.normal(k_img, (N, C, H, W), jnp.float32)           # NCHW
    vec_topic = jax.nn.softmax(
        jax.random.normal(k_topic, (N, NUM_TOPICS), jnp.float32), axis=-1)
    eps = jax.random.normal(k_eps, (N, ZD_DIM), jnp.float32)            # rsample noise

    params = init_params(k_params, C, H, W, IMG_H_DIM, NUM_TOPICS, ZD_DIM)

    (mu, scale), zd_q = encoder_sandwich_forward(img, vec_topic, params, eps)
    jax.block_until_ready((mu, scale, zd_q))

    assert mu.shape == (N, ZD_DIM) and scale.shape == (N, ZD_DIM) and zd_q.shape == (N, ZD_DIM)
    assert bool(jnp.all(scale > 0.0))
    assert bool(jnp.all(jnp.isfinite(mu))) and bool(jnp.all(jnp.isfinite(zd_q)))
    print("KERNEL_OK")
</pallas_src>

<mosaic_0001>
module attributes {stable_mosaic.version = 11 : i64} {
  func.func @_encoder_sandwich_kernel(%arg0: memref<8x1024xbf16, #tpu.memory_space<vmem>>, %arg1: memref<8x8xbf16, #tpu.memory_space<vmem>>, %arg2: memref<1024x32xbf16, #tpu.memory_space<vmem>>, %arg3: memref<1x32xf32, #tpu.memory_space<vmem>>, %arg4: memref<40x32xbf16, #tpu.memory_space<vmem>>, %arg5: memref<1x32xf32, #tpu.memory_space<vmem>>, %arg6: memref<8x16xf32, #tpu.memory_space<vmem>>, %arg7: memref<8x48xf32, #tpu.memory_space<vmem>>) attributes {dimension_semantics = [], scalar_prefetch = 0 : i64, scratch_operands = 0 : i64, tpu.core_type = #tpu.core_type<tc>} {
    %c0 = arith.constant 0 : index
    %c0_0 = arith.constant 0 : index
    %0 = vector.load %arg0[%c0, %c0_0] : memref<8x1024xbf16, #tpu.memory_space<vmem>>, vector<8x1024xbf16>
    %c0_1 = arith.constant 0 : index
    %c0_2 = arith.constant 0 : index
    %1 = vector.load %arg1[%c0_1, %c0_2] : memref<8x8xbf16, #tpu.memory_space<vmem>>, vector<8x8xbf16>
    %c0_3 = arith.constant 0 : index
    %c0_4 = arith.constant 0 : index
    %2 = vector.load %arg2[%c0_3, %c0_4] : memref<1024x32xbf16, #tpu.memory_space<vmem>>, vector<1024x32xbf16>
    %cst = arith.constant dense<0.000000e+00> : vector<8x32xf32>
    %3 = tpu.matmul %0, %2, %cst {dimension_numbers = #tpu.dot_dimension_numbers<[1], [0], [0], [1], [0, 0, 1, 1], [], []>} : vector<8x1024xbf16>, vector<1024x32xbf16>, vector<8x32xf32> -> vector<8x32xf32>
    %c0_5 = arith.constant 0 : index
    %c0_6 = arith.constant 0 : index
    %4 = vector.load %arg3[%c0_5, %c0_6] : memref<1x32xf32, #tpu.memory_space<vmem>>, vector<1x32xf32>
    %5 = vector.broadcast %4 : vector<1x32xf32> to vector<8x32xf32>
    %6 = arith.addf %3, %5 : vector<8x32xf32>
    %cst_7 = arith.constant 0.000000e+00 : f32
    %7 = vector.broadcast %cst_7 : f32 to vector<8x32xf32>
    %8 = arith.maximumf %6, %7 : vector<8x32xf32>
    %9 = arith.truncf %8 : vector<8x32xf32> to vector<8x32xbf16>
    %c0_8 = arith.constant 0 : index
    %c0_9 = arith.constant 0 : index
    %10 = vector.load %arg4[%c0_8, %c0_9] : memref<40x32xbf16, #tpu.memory_space<vmem>>, vector<32x32xbf16>
    %c32 = arith.constant 32 : index
    %c0_10 = arith.constant 0 : index
    %11 = vector.load %arg4[%c32, %c0_10] : memref<40x32xbf16, #tpu.memory_space<vmem>>, vector<8x32xbf16>
    %cst_11 = arith.constant dense<0.000000e+00> : vector<8x32xf32>
    %12 = tpu.matmul %9, %10, %cst_11 {dimension_numbers = #tpu.dot_dimension_numbers<[1], [0], [0], [1], [0, 0, 1, 1], [], []>} : vector<8x32xbf16>, vector<32x32xbf16>, vector<8x32xf32> -> vector<8x32xf32>
    %cst_12 = arith.constant dense<0.000000e+00> : vector<8x32xf32>
    %13 = tpu.matmul %1, %11, %cst_12 {dimension_numbers = #tpu.dot_dimension_numbers<[1], [0], [0], [1], [0, 0, 1, 1], [], []>} : vector<8x8xbf16>, vector<8x32xbf16>, vector<8x32xf32> -> vector<8x32xf32>
    %14 = arith.addf %12, %13 : vector<8x32xf32>
    %c0_13 = arith.constant 0 : index
    %c0_14 = arith.constant 0 : index
    %15 = vector.load %arg5[%c0_13, %c0_14] : memref<1x32xf32, #tpu.memory_space<vmem>>, vector<1x32xf32>
    %16 = vector.broadcast %15 : vector<1x32xf32> to vector<8x32xf32>
    %17 = arith.addf %14, %16 : vector<8x32xf32>
    %18 = vector.extract_strided_slice %17 {offsets = [0, 0], sizes = [8, 16], strides = [1, 1]} : vector<8x32xf32> to vector<8x16xf32>
    %19 = vector.extract_strided_slice %17 {offsets = [0, 16], sizes = [8, 16], strides = [1, 1]} : vector<8x32xf32> to vector<8x16xf32>
    %cst_15 = arith.constant 0.000000e+00 : f32
    %20 = vector.broadcast %cst_15 : f32 to vector<8x16xf32>
    %21 = arith.maximumf %19, %20 : vector<8x16xf32>
    %22 = vector.broadcast %cst_15 : f32 to vector<8x16xf32>
    %23 = arith.subf %19, %22 : vector<8x16xf32>
    %24 = arith.cmpf one, %23, %23 : vector<8x16xf32>
    %25 = vector.broadcast %cst_15 : f32 to vector<8x16xf32>
    %26 = arith.addf %19, %25 : vector<8x16xf32>
    %27 = math.absf %23 : vector<8x16xf32>
    %cst_16 = arith.constant 0.000000e+00 : f32
    %28 = vector.broadcast %cst_16 : f32 to vector<8x16xf32>
    %29 = arith.subf %28, %27 : vector<8x16xf32>
    %30 = math.exp %29 : vector<8x16xf32>
    %31 = math.log1p %30 : vector<8x16xf32>
    %32 = arith.addf %21, %31 : vector<8x16xf32>
    %33 = arith.select %24, %26, %32 : vector<8x16xi1>, vector<8x16xf32>
    %cst_17 = arith.constant 1.000000e-07 : f32
    %34 = vector.broadcast %cst_17 : f32 to vector<8x16xf32>
    %35 = arith.addf %33, %34 : vector<8x16xf32>
    %c0_18 = arith.constant 0 : index
    %c0_19 = arith.constant 0 : index
    %36 = vector.load %arg6[%c0_18, %c0_19] : memref<8x16xf32, #tpu.memory_space<vmem>>, vector<8x16xf32>
    %37 = arith.mulf %35, %36 : vector<8x16xf32>
    %38 = arith.addf %18, %37 : vector<8x16xf32>
    %39 = tpu.concatenate %18, %35, %38 in 1 : vector<8x16xf32>, vector<8x16xf32>, vector<8x16xf32> -> vector<8x48xf32>
    %c0_20 = arith.constant 0 : index
    %c0_21 = arith.constant 0 : index
    %40 = vector.load %arg7[%c0_20, %c0_21] : memref<8x48xf32, #tpu.memory_space<vmem>>, vector<8x48xf32>
    tpu.vector_store %arg7[%c0_20, %c0_21], %39 {strides = array<i32>} : memref<8x48xf32, #tpu.memory_space<vmem>>, vector<8x48xf32>,
    return
  }
}

</mosaic_0001>

<llo_original>
// kernel: tpu_custom_call.1
$region0: #{tpu_custom_call.1}
  #allocation0 [shape = 'u32[]', space=smem, size = 0x4, offset = 0x4, fixed_abs, tag = 'smem constant byte address 0x4 - core index']
  #allocation1 [shape = 'u32[144,128]{1,0:T(1,128)}', space=vmem, size = 0x12000, scoped, tag = 'internal scratch']
  %s0 = inlined_call_operand.vmem [shape: bf16[8,1024], index: 0, kind: input, shape index: {}]
  %s1 = inlined_call_operand.vmem [shape: bf16[8,8], index: 1, kind: input, shape index: {}]
  %s2 = inlined_call_operand.vmem [shape: bf16[1024,32], index: 2, kind: input, shape index: {}]
  %s3 = inlined_call_operand.vmem [shape: f32[1,32], index: 3, kind: input, shape index: {}]
  %s4 = inlined_call_operand.vmem [shape: bf16[40,32], index: 4, kind: input, shape index: {}]
  %s5 = inlined_call_operand.vmem [shape: f32[1,32], index: 5, kind: input, shape index: {}]
  %s6 = inlined_call_operand.vmem [shape: f32[8,16], index: 6, kind: input, shape index: {}]
  %s7 = inlined_call_operand.hbm [shape: f32[8,48], index: 7, kind: output, shape index: {}]
  %s8 = sld [smem:[#allocation0]]
  $region38: #{tpu_custom_call.1} parent=0
    _
  %s10 = ssub.s32 1, %s8
  %s11 = scalar_select 0, %s10, %s8
  $region1: #{tpu_custom_call.1} parent=0
    #allocation2 [shape = 'u8[4096]{0}', space=vmem, size = 0x1000, scoped, tag = 'output window, operand 0, single buffered']
    #allocation3 [shape = 's32[1]{0}', space=sflag, size = 0x4, scoped, tag = 'scoped memory for tpu_custom_call.1']
    %12 = vsyncpa [#allocation3], 0
    // Predicated region
    $region2: #{tpu_custom_call.1} parent=1 // pred_check
      _
    $region3: #{tpu_custom_call.1} parent=1 // pred_check_branch
      %14 = sbr.rel (0) target = $region5
    $region4: #{tpu_custom_call.1} parent=1 // pred_region
      _
    $region5: #{tpu_custom_call.1} parent=1 // pred_fallthru
      _
    // Predicated region
    $region6: #{tpu_custom_call.1} parent=1 // pred_check
      _
    $region7: #{tpu_custom_call.1} parent=1 // pred_check_branch
      %16 = sbr.rel (0) target = $region9
    $region8: #{tpu_custom_call.1} parent=1 // pred_region
      _
    $region9: #{tpu_custom_call.1} parent=1 // pred_fallthru
      _
    // Predicated region
    $region10: #{tpu_custom_call.1} parent=1 // pred_check
      _
    $region11: #{tpu_custom_call.1} parent=1 // pred_check_branch
      %18 = sbr.rel (0) target = $region13
    $region12: #{tpu_custom_call.1} parent=1 // pred_region
      _
    $region13: #{tpu_custom_call.1} parent=1 // pred_fallthru
      _
    // Predicated region
    $region14: #{tpu_custom_call.1} parent=1 // pred_check
      _
    $region15: #{tpu_custom_call.1} parent=1 // pred_check_branch
      %20 = sbr.rel (0) target = $region17
    $region16: #{tpu_custom_call.1} parent=1 // pred_region
      _
    $region17: #{tpu_custom_call.1} parent=1 // pred_fallthru
      _
    // Predicated region
    $region18: #{tpu_custom_call.1} parent=1 // pred_check
      _
    $region19: #{tpu_custom_call.1} parent=1 // pred_check_branch
      %22 = sbr.rel (0) target = $region21
    $region20: #{tpu_custom_call.1} parent=1 // pred_region
      _
    $region21: #{tpu_custom_call.1} parent=1 // pred_fallthru
      _
    // Predicated region
    $region22: #{tpu_custom_call.1} parent=1 // pred_check
      _
    $region23: #{tpu_custom_call.1} parent=1 // pred_check_branch
      %24 = sbr.rel (0) target = $region25
    $region24: #{tpu_custom_call.1} parent=1 // pred_region
      _
    $region25: #{tpu_custom_call.1} parent=1 // pred_fallthru
      _
    // Predicated region
    $region26: #{tpu_custom_call.1} parent=1 // pred_check
      _
    $region27: #{tpu_custom_call.1} parent=1 // pred_check_branch
      %26 = sbr.rel (0) target = $region29
    $region28: #{tpu_custom_call.1} parent=1 // pred_region
      _
    $region29: #{tpu_custom_call.1} parent=1 // pred_fallthru
      _
    %v28 = vld [vmem:[%s0] sm:$0xff]
    %v29 = vld [vmem:[%s0 + $0x8] sm:$0xff]
    %v30 = vld [vmem:[%s0 + $0x10] sm:$0xff]
    %v31 = vld [vmem:[%s0 + $0x18] sm:$0xff]
    %v32 = vld [vmem:[%s1] sm:$0xf]
    %v33 = vld [vmem:[%s2] sm:$0xf]
    %v34 = vld [vmem:[%s2 + $0x4] sm:$0xf]
    %v35 = vld [vmem:[%s2 + $0x8] sm:$0xf]
    %v36 = vld [vmem:[%s2 + $0xc] sm:$0xf]
    %v37 = vld [vmem:[%s2 + $0x10] sm:$0xf]
    %v38 = vld [vmem:[%s2 + $0x14] sm:$0xf]
    %v39 = vld [vmem:[%s2 + $0x18] sm:$0xf]
    %v40 = vld [vmem:[%s2 + $0x1c] sm:$0xf]
    %v41 = vld [vmem:[%s2 + $0x20] sm:$0xf]
    %v42 = vld [vmem:[%s2 + $0x24] sm:$0xf]
    %v43 = vld [vmem:[%s2 + $0x28] sm:$0xf]
    %v44 = vld [vmem:[%s2 + $0x2c] sm:$0xf]
    %v45 = vld [vmem:[%s2 + $0x30] sm:$0xf]
    %v46 = vld [vmem:[%s2 + $0x34] sm:$0xf]
    %v47 = vld [vmem:[%s2 + $0x38] sm:$0xf]
    %v48 = vld [vmem:[%s2 + $0x3c] sm:$0xf]
    %v49 = vld [vmem:[%s2 + $0x40] sm:$0xf]
    %v50 = vld [vmem:[%s2 + $0x44] sm:$0xf]
    %v51 = vld [vmem:[%s2 + $0x48] sm:$0xf]
    %v52 = vld [vmem:[%s2 + $0x4c] sm:$0xf]
    %v53 = vld [vmem:[%s2 + $0x50] sm:$0xf]
    %v54 = vld [vmem:[%s2 + $0x54] sm:$0xf]
    %v55 = vld [vmem:[%s2 + $0x58] sm:$0xf]
    %v56 = vld [vmem:[%s2 + $0x5c] sm:$0xf]
    %v57 = vld [vmem:[%s2 + $0x60] sm:$0xf]
    %v58 = vld [vmem:[%s2 + $0x64] sm:$0xf]
    %v59 = vld [vmem:[%s2 + $0x68] sm:$0xf]
    %v60 = vld [vmem:[%s2 + $0x6c] sm:$0xf]
    %v61 = vld [vmem:[%s2 + $0x70] sm:$0xf]
    %v62 = vld [vmem:[%s2 + $0x74] sm:$0xf]
    %v63 = vld [vmem:[%s2 + $0x78] sm:$0xf]
    %v64 = vld [vmem:[%s2 + $0x7c] sm:$0xf]
    %v65 = vld [vmem:[%s2 + $0x80] sm:$0xf]
    %v66 = vld [vmem:[%s2 + $0x84] sm:$0xf]
    %v67 = vld [vmem:[%s2 + $0x88] sm:$0xf]
    %v68 = vld [vmem:[%s2 + $0x8c] sm:$0xf]
    %v69 = vld [vmem:[%s2 + $0x90] sm:$0xf]
    %v70 = vld [vmem:[%s2 + $0x94] sm:$0xf]
    %v71 = vld [vmem:[%s2 + $0x98] sm:$0xf]
    %v72 = vld [vmem:[%s2 + $0x9c] sm:$0xf]
    %v73 = vld [vmem:[%s2 + $0xa0] sm:$0xf]
    %v74 = vld [vmem:[%s2 + $0xa4] sm:$0xf]
    %v75 = vld [vmem:[%s2 + $0xa8] sm:$0xf]
    %v76 = vld [vmem:[%s2 + $0xac] sm:$0xf]
    %v77 = vld [vmem:[%s2 + $0xb0] sm:$0xf]
    %v78 = vld [vmem:[%s2 + $0xb4] sm:$0xf]
    %v79 = vld [vmem:[%s2 + $0xb8] sm:$0xf]
    %v80 = vld [vmem:[%s2 + $0xbc] sm:$0xf]
    %v81 = vld [vmem:[%s2 + $0xc0] sm:$0xf]
    %v82 = vld [vmem:[%s2 + $0xc4] sm:$0xf]
    %v83 = vld [vmem:[%s2 + $0xc8] sm:$0xf]
    %v84 = vld [vmem:[%s2 + $0xcc] sm:$0xf]
    %v85 = vld [vmem:[%s2 + $0xd0] sm:$0xf]
    %v86 = vld [vmem:[%s2 + $0xd4] sm:$0xf]
    %v87 = vld [vmem:[%s2 + $0xd8] sm:$0xf]
    %v88 = vld [vmem:[%s2 + $0xdc] sm:$0xf]
    %v89 = vld [vmem:[%s2 + $0xe0] sm:$0xf]
    %v90 = vld [vmem:[%s2 + $0xe4] sm:$0xf]
    %v91 = vld [vmem:[%s2 + $0xe8] sm:$0xf]
    %v92 = vld [vmem:[%s2 + $0xec] sm:$0xf]
    %v93 = vld [vmem:[%s2 + $0xf0] sm:$0xf]
    %v94 = vld [vmem:[%s2 + $0xf4] sm:$0xf]
    %v95 = vld [vmem:[%s2 + $0xf8] sm:$0xf]
    %v96 = vld [vmem:[%s2 + $0xfc] sm:$0xf]
    %v97 = vld [vmem:[%s2 + $0x100] sm:$0xf]
    %v98 = vld [vmem:[%s2 + $0x104] sm:$0xf]
    %v99 = vld [vmem:[%s2 + $0x108] sm:$0xf]
    %v100 = vld [vmem:[%s2 + $0x10c] sm:$0xf]
    %v101 = vld [vmem:[%s2 + $0x110] sm:$0xf]
    %v102 = vld [vmem:[%s2 + $0x114] sm:$0xf]
    %v103 = vld [vmem:[%s2 + $0x118] sm:$0xf]
    %v104 = vld [vmem:[%s2 + $0x11c] sm:$0xf]
    %v105 = vld [vmem:[%s2 + $0x120] sm:$0xf]
    %v106 = vld [vmem:[%s2 + $0x124] sm:$0xf]
    %v107 = vld [vmem:[%s2 + $0x128] sm:$0xf]
    %v108 = vld [vmem:[%s2 + $0x12c] sm:$0xf]
    %v109 = vld [vmem:[%s2 + $0x130] sm:$0xf]
    %v110 = vld [vmem:[%s2 + $0x134] sm:$0xf]
    %v111 = vld [vmem:[%s2 + $0x138] sm:$0xf]
    %v112 = vld [vmem:[%s2 + $0x13c] sm:$0xf]
    %v113 = vld [vmem:[%s2 + $0x140] sm:$0xf]
    %v114 = vld [vmem:[%s2 + $0x144] sm:$0xf]
    %v115 = vld [vmem:[%s2 + $0x148] sm:$0xf]
    %v116 = vld [vmem:[%s2 + $0x14c] sm:$0xf]
    %v117 = vld [vmem:[%s2 + $0x150] sm:$0xf]
    %v118 = vld [vmem:[%s2 + $0x154] sm:$0xf]
    %v119 = vld [vmem:[%s2 + $0x158] sm:$0xf]
    %v120 = vld [vmem:[%s2 + $0x15c] sm:$0xf]
    %v121 = vld [vmem:[%s2 + $0x160] sm:$0xf]
    %v122 = vld [vmem:[%s2 + $0x164] sm:$0xf]
    %v123 = vld [vmem:[%s2 + $0x168] sm:$0xf]
    %v124 = vld [vmem:[%s2 + $0x16c] sm:$0xf]
    %v125 = vld [vmem:[%s2 + $0x170] sm:$0xf]
    %v126 = vld [vmem:[%s2 + $0x174] sm:$0xf]
    %v127 = vld [vmem:[%s2 + $0x178] sm:$0xf]
    %v128 = vld [vmem:[%s2 + $0x17c] sm:$0xf]
    %v129 = vld [vmem:[%s2 + $0x180] sm:$0xf]
    %v130 = vld [vmem:[%s2 + $0x184] sm:$0xf]
    %v131 = vld [vmem:[%s2 + $0x188] sm:$0xf]
    %v132 = vld [vmem:[%s2 + $0x18c] sm:$0xf]
    %v133 = vld [vmem:[%s2 + $0x190] sm:$0xf]
    %v134 = vld [vmem:[%s2 + $0x194] sm:$0xf]
    %v135 = vld [vmem:[%s2 + $0x198] sm:$0xf]
    %v136 = vld [vmem:[%s2 + $0x19c] sm:$0xf]
    %v137 = vld [vmem:[%s2 + $0x1a0] sm:$0xf]
    %v138 = vld [vmem:[%s2 + $0x1a4] sm:$0xf]
    %v139 = vld [vmem:[%s2 + $0x1a8] sm:$0xf]
    %v140 = vld [vmem:[%s2 + $0x1ac] sm:$0xf]
    %v141 = vld [vmem:[%s2 + $0x1b0] sm:$0xf]
    %v142 = vld [vmem:[%s2 + $0x1b4] sm:$0xf]
    %v143 = vld [vmem:[%s2 + $0x1b8] sm:$0xf]
    %v144 = vld [vmem:[%s2 + $0x1bc] sm:$0xf]
    %v145 = vld [vmem:[%s2 + $0x1c0] sm:$0xf]
    %v146 = vld [vmem:[%s2 + $0x1c4] sm:$0xf]
    %v147 = vld [vmem:[%s2 + $0x1c8] sm:$0xf]
    %v148 = vld [vmem:[%s2 + $0x1cc] sm:$0xf]
    %v149 = vld [vmem:[%s2 + $0x1d0] sm:$0xf]
    %v150 = vld [vmem:[%s2 + $0x1d4] sm:$0xf]
    %v151 = vld [vmem:[%s2 + $0x1d8] sm:$0xf]
    %v152 = vld [vmem:[%s2 + $0x1dc] sm:$0xf]
    %v153 = vld [vmem:[%s2 + $0x1e0] sm:$0xf]
    %v154 = vld [vmem:[%s2 + $0x1e4] sm:$0xf]
    %v155 = vld [vmem:[%s2 + $0x1e8] sm:$0xf]
    %v156 = vld [vmem:[%s2 + $0x1ec] sm:$0xf]
    %v157 = vld [vmem:[%s2 + $0x1f0] sm:$0xf]
    %v158 = vld [vmem:[%s2 + $0x1f4] sm:$0xf]
    %v159 = vld [vmem:[%s2 + $0x1f8] sm:$0xf]
    %v160 = vld [vmem:[%s2 + $0x1fc] sm:$0xf]
    %v161 = vld [vmem:[%s3] sm:$0x1]
    %v163 = vlaneseq
    %v164 = vshrl.u32 %v163, 7
    %v165 = vsub.s32 0, %v164
    %v166 = vrot.slane %v161, %v165
    %v172 = vunpack.c.l.b16 %v28
    %v173 = vunpack.c.h.b16 %v28
    %v174 = vunpack.c.l.b16 %v29
    %v175 = vunpack.c.h.b16 %v29
    %v176 = vunpack.c.l.b16 %v30
    %v177 = vunpack.c.h.b16 %v30
    %v178 = vunpack.c.l.b16 %v31
    %v179 = vunpack.c.h.b16 %v31
    %v180 = vpack.c.b16 %v172, %v172
    %v181 = vpack.c.b16 %v173, %v173
    %v182 = vpack.c.b16 %v174, %v174
    %v183 = vpack.c.b16 %v175, %v175
    %v184 = vpack.c.b16 %v176, %v176
    %v185 = vpack.c.b16 %v177, %v177
    %v186 = vpack.c.b16 %v178, %v178
    %v187 = vpack.c.b16 %v179, %v179
    %v324 = vunpack.c.l.b16 %v33
    %v325 = vunpack.c.l.b16 %v34
    %v326 = vunpack.c.l.b16 %v35
    %v327 = vunpack.c.l.b16 %v36
    %v328 = vunpack.c.l.b16 %v37
    %v329 = vunpack.c.l.b16 %v38
    %v330 = vunpack.c.l.b16 %v39
    %v331 = vunpack.c.l.b16 %v40
    %v332 = vunpack.c.l.b16 %v41
    %v333 = vunpack.c.l.b16 %v42
    %v334 = vunpack.c.l.b16 %v43
    %v335 = vunpack.c.l.b16 %v44
    %v336 = vunpack.c.l.b16 %v45
    %v337 = vunpack.c.l.b16 %v46
    %v338 = vunpack.c.l.b16 %v47
    %v339 = vunpack.c.l.b16 %v48
    %v340 = vunpack.c.l.b16 %v49
    %v341 = vunpack.c.l.b16 %v50
    %v342 = vunpack.c.l.b16 %v51
    %v343 = vunpack.c.l.b16 %v52
    %v344 = vunpack.c.l.b16 %v53
    %v345 = vunpack.c.l.b16 %v54
    %v346 = vunpack.c.l.b16 %v55
    %v347 = vunpack.c.l.b16 %v56
    %v348 = vunpack.c.l.b16 %v57
    %v349 = vunpack.c.l.b16 %v58
    %v350 = vunpack.c.l.b16 %v59
    %v351 = vunpack.c.l.b16 %v60
    %v352 = vunpack.c.l.b16 %v61
    %v353 = vunpack.c.l.b16 %v62
    %v354 = vunpack.c.l.b16 %v63
    %v355 = vunpack.c.l.b16 %v64
    %v356 = vunpack.c.l.b16 %v65
    %v357 = vunpack.c.l.b16 %v66
    %v358 = vunpack.c.l.b16 %v67
    %v359 = vunpack.c.l.b16 %v68
    %v360 = vunpack.c.l.b16 %v69
    %v361 = vunpack.c.l.b16 %v70
    %v362 = vunpack.c.l.b16 %v71
    %v363 = vunpack.c.l.b16 %v72
    %v364 = vunpack.c.l.b16 %v73
    %v365 = vunpack.c.l.b16 %v74
    %v366 = vunpack.c.l.b16 %v75
    %v367 = vunpack.c.l.b16 %v76
    %v368 = vunpack.c.l.b16 %v77
    %v369 = vunpack.c.l.b16 %v78
    %v370 = vunpack.c.l.b16 %v79
    %v371 = vunpack.c.l.b16 %v80
    %v372 = vunpack.c.l.b16 %v81
    %v373 = vunpack.c.l.b16 %v82
    %v374 = vunpack.c.l.b16 %v83
    %v375 = vunpack.c.l.b16 %v84
    %v376 = vunpack.c.l.b16 %v85
    %v377 = vunpack.c.l.b16 %v86
    %v378 = vunpack.c.l.b16 %v87
    %v379 = vunpack.c.l.b16 %v88
    %v380 = vunpack.c.l.b16 %v89
    %v381 = vunpack.c.l.b16 %v90
    %v382 = vunpack.c.l.b16 %v91
    %v383 = vunpack.c.l.b16 %v92
    %v384 = vunpack.c.l.b16 %v93
    %v385 = vunpack.c.l.b16 %v94
    %v386 = vunpack.c.l.b16 %v95
    %v387 = vunpack.c.l.b16 %v96
    %v388 = vunpack.c.l.b16 %v97
    %v389 = vunpack.c.l.b16 %v98
    %v390 = vunpack.c.l.b16 %v99
    %v391 = vunpack.c.l.b16 %v100
    %v392 = vunpack.c.l.b16 %v101
    %v393 = vunpack.c.l.b16 %v102
    %v394 = vunpack.c.l.b16 %v103
    %v395 = vunpack.c.l.b16 %v104
    %v396 = vunpack.c.l.b16 %v105
    %v397 = vunpack.c.l.b16 %v106
    %v398 = vunpack.c.l.b16 %v107
    %v399 = vunpack.c.l.b16 %v108
    %v400 = vunpack.c.l.b16 %v109
    %v401 = vunpack.c.l.b16 %v110
    %v402 = vunpack.c.l.b16 %v111
    %v403 = vunpack.c.l.b16 %v112
    %v404 = vunpack.c.l.b16 %v113
    %v405 = vunpack.c.l.b16 %v114
    %v406 = vunpack.c.l.b16 %v115
    %v407 = vunpack.c.l.b16 %v116
    %v408 = vunpack.c.l.b16 %v117
    %v409 = vunpack.c.l.b16 %v118
    %v410 = vunpack.c.l.b16 %v119
    %v411 = vunpack.c.l.b16 %v120
    %v412 = vunpack.c.l.b16 %v121
    %v413 = vunpack.c.l.b16 %v122
    %v414 = vunpack.c.l.b16 %v123
    %v415 = vunpack.c.l.b16 %v124
    %v416 = vunpack.c.l.b16 %v125
    %v417 = vunpack.c.l.b16 %v126
    %v418 = vunpack.c.l.b16 %v127
    %v419 = vunpack.c.l.b16 %v128
    %v420 = vunpack.c.l.b16 %v129
    %v421 = vunpack.c.l.b16 %v130
    %v422 = vunpack.c.l.b16 %v131
    %v423 = vunpack.c.l.b16 %v132
    %v424 = vunpack.c.l.b16 %v133
    %v425 = vunpack.c.l.b16 %v134
    %v426 = vunpack.c.l.b16 %v135
    %v427 = vunpack.c.l.b16 %v136
    %v428 = vunpack.c.l.b16 %v137
    %v429 = vunpack.c.l.b16 %v138
    %v430 = vunpack.c.l.b16 %v139
    %v431 = vunpack.c.l.b16 %v140
    %v432 = vunpack.c.l.b16 %v141
    %v433 = vunpack.c.l.b16 %v142
    %v434 = vunpack.c.l.b16 %v143
    %v435 = vunpack.c.l.b16 %v144
    %v436 = vunpack.c.l.b16 %v145
    %v437 = vunpack.c.l.b16 %v146
    %v438 = vunpack.c.l.b16 %v147
    %v439 = vunpack.c.l.b16 %v148
    %v440 = vunpack.c.l.b16 %v149
    %v441 = vunpack.c.l.b16 %v150
    %v442 = vunpack.c.l.b16 %v151
    %v443 = vunpack.c.l.b16 %v152
    %v444 = vunpack.c.l.b16 %v153
    %v445 = vunpack.c.l.b16 %v154
    %v446 = vunpack.c.l.b16 %v155
    %v447 = vunpack.c.l.b16 %v156
    %v448 = vunpack.c.l.b16 %v157
    %v449 = vunpack.c.l.b16 %v158
    %v450 = vunpack.c.l.b16 %v159
    %v451 = vunpack.c.l.b16 %v160
    %v452 = vpack.c.b16 %v325, %v324
    %v453 = vpack.c.b16 %v327, %v326
    %v454 = vpack.c.b16 %v329, %v328
    %v455 = vpack.c.b16 %v331, %v330
    %v456 = vpack.c.b16 %v333, %v332
    %v457 = vpack.c.b16 %v335, %v334
    %v458 = vpack.c.b16 %v337, %v336
    %v459 = vpack.c.b16 %v339, %v338
    %v460 = vpack.c.b16 %v341, %v340
    %v461 = vpack.c.b16 %v343, %v342
    %v462 = vpack.c.b16 %v345, %v344
    %v463 = vpack.c.b16 %v347, %v346
    %v464 = vpack.c.b16 %v349, %v348
    %v465 = vpack.c.b16 %v351, %v350
    %v466 = vpack.c.b16 %v353, %v352
    %v467 = vpack.c.b16 %v355, %v354
    %v468 = vpack.c.b16 %v357, %v356
    %v469 = vpack.c.b16 %v359, %v358
    %v470 = vpack.c.b16 %v361, %v360
    %v471 = vpack.c.b16 %v363, %v362
    %v472 = vpack.c.b16 %v365, %v364
    %v473 = vpack.c.b16 %v367, %v366
    %v474 = vpack.c.b16 %v369, %v368
    %v475 = vpack.c.b16 %v371, %v370
    %v476 = vpack.c.b16 %v373, %v372
    %v477 = vpack.c.b16 %v375, %v374
    %v478 = vpack.c.b16 %v377, %v376
    %v479 = vpack.c.b16 %v379, %v378
    %v480 = vpack.c.b16 %v381, %v380
    %v481 = vpack.c.b16 %v383, %v382
    %v482 = vpack.c.b16 %v385, %v384
    %v483 = vpack.c.b16 %v387, %v386
    %v484 = vpack.c.b16 %v389, %v388
    %v485 = vpack.c.b16 %v391, %v390
    %v486 = vpack.c.b16 %v393, %v392
    %v487 = vpack.c.b16 %v395, %v394
    %v488 = vpack.c.b16 %v397, %v396
    %v489 = vpack.c.b16 %v399, %v398
    %v490 = vpack.c.b16 %v401, %v400
    %v491 = vpack.c.b16 %v403, %v402
    %v492 = vpack.c.b16 %v405, %v404
    %v493 = vpack.c.b16 %v407, %v406
    %v494 = vpack.c.b16 %v409, %v408
    %v495 = vpack.c.b16 %v411, %v410
    %v496 = vpack.c.b16 %v413, %v412
    %v497 = vpack.c.b16 %v415, %v414
    %v498 = vpack.c.b16 %v417, %v416
    %v499 = vpack.c.b16 %v419, %v418
    %v500 = vpack.c.b16 %v421, %v420
    %v501 = vpack.c.b16 %v423, %v422
    %v502 = vpack.c.b16 %v425, %v424
    %v503 = vpack.c.b16 %v427, %v426
    %v504 = vpack.c.b16 %v429, %v428
    %v505 = vpack.c.b16 %v431, %v430
    %v506 = vpack.c.b16 %v433, %v432
    %v507 = vpack.c.b16 %v435, %v434
    %v508 = vpack.c.b16 %v437, %v436
    %v509 = vpack.c.b16 %v439, %v438
    %v510 = vpack.c.b16 %v441, %v440
    %v511 = vpack.c.b16 %v443, %v442
    %v512 = vpack.c.b16 %v445, %v444
    %v513 = vpack.c.b16 %v447, %v446
    %v514 = vpack.c.b16 %v449, %v448
    %v515 = vpack.c.b16 %v451, %v450
    %580 = vmatprep.subr.bf16.mxu0 0
    %581 = vmatpush1.bf16.msra.mxu0 %v452
    %582 = vmatprep.subr.bf16.mxu0 0
    %583 = vmatpush1.bf16.msra.mxu0 %v453
    %584 = vmatprep.subr.bf16.mxu0 0
    %585 = vmatpush1.bf16.msra.mxu0 %v454
    %586 = vmatprep.subr.bf16.mxu0 0
    %587 = vmatpush1.bf16.msra.mxu0 %v455
    %588 = vmatprep.subr.bf16.mxu0 0
    %589 = vmatpush1.bf16.msra.mxu0 %v456
    %590 = vmatprep.subr.bf16.mxu0 0
    %591 = vmatpush1.bf16.msra.mxu0 %v457
    %592 = vmatprep.subr.bf16.mxu0 0
    %593 = vmatpush1.bf16.msra.mxu0 %v458
    %594 = vmatprep.subr.bf16.mxu0 0
    %595 = vmatpush1.bf16.msra.mxu0 %v459
    %596 = vmatprep.subr.bf16.mxu0 0
    %597 = vmatpush1.bf16.msra.mxu0 %v460
    %598 = vmatprep.subr.bf16.mxu0 0
    %599 = vmatpush1.bf16.msra.mxu0 %v461
    %600 = vmatprep.subr.bf16.mxu0 0
    %601 = vmatpush1.bf16.msra.mxu0 %v462
    %602 = vmatprep.subr.bf16.mxu0 0
    %603 = vmatpush1.bf16.msra.mxu0 %v463
    %604 = vmatprep.subr.bf16.mxu0 0
    %605 = vmatpush1.bf16.msra.mxu0 %v464
    %606 = vmatprep.subr.bf16.mxu0 0
    %607 = vmatpush1.bf16.msra.mxu0 %v465
    %608 = vmatprep.subr.bf16.mxu0 0
    %609 = vmatpush1.bf16.msra.mxu0 %v466
    %610 = vmatprep.subr.bf16.mxu0 0
    %611 = vmatpush1.bf16.msra.mxu0 %v467
    %612 = vmatprep.mubr.bf16.mxu0 %v181
    %613 = vmatmul.mubr.bf16.gmra.mrb[0].mxu0 %v180
    %v614 = vpop.f32.mrb[0].mxu0
    %v615 = vadd.f32 %v166, %v614
    %v616 = vpop.f32.mrb[0].mxu0
    %v617 = vpop.f32.mrb[0].mxu0
    %v618 = vpop.f32.mrb[0].mxu0
    %619 = vdwg.mxu0
    %620 = vmatprep.subr.bf16.mxu0 0
    %621 = vmatpush1.bf16.msra.mxu0 %v468
    %622 = vmatprep.subr.bf16.mxu0 0
    %623 = vmatpush1.bf16.msra.mxu0 %v469
    %624 = vmatprep.subr.bf16.mxu0 0
    %625 = vmatpush1.bf16.msra.mxu0 %v470
    %626 = vmatprep.subr.bf16.mxu0 0
    %627 = vmatpush1.bf16.msra.mxu0 %v471
    %628 = vmatprep.subr.bf16.mxu0 0
    %629 = vmatpush1.bf16.msra.mxu0 %v472
    %630 = vmatprep.subr.bf16.mxu0 0
    %631 = vmatpush1.bf16.msra.mxu0 %v473
    %632 = vmatprep.subr.bf16.mxu0 0
    %633 = vmatpush1.bf16.msra.mxu0 %v474
    %634 = vmatprep.subr.bf16.mxu0 0
    %635 = vmatpush1.bf16.msra.mxu0 %v475
    %636 = vmatprep.subr.bf16.mxu0 0
    %637 = vmatpush1.bf16.msra.mxu0 %v476
    %638 = vmatprep.subr.bf16.mxu0 0
    %639 = vmatpush1.bf16.msra.mxu0 %v477
    %640 = vmatprep.subr.bf16.mxu0 0
    %641 = vmatpush1.bf16.msra.mxu0 %v478
    %642 = vmatprep.subr.bf16.mxu0 0
    %643 = vmatpush1.bf16.msra.mxu0 %v479
    %644 = vmatprep.subr.bf16.mxu0 0
    %645 = vmatpush1.bf16.msra.mxu0 %v480
    %646 = vmatprep.subr.bf16.mxu0 0
    %647 = vmatpush1.bf16.msra.mxu0 %v481
    %648 = vmatprep.subr.bf16.mxu0 0
    %649 = vmatpush1.bf16.msra.mxu0 %v482
    %650 = vmatprep.subr.bf16.mxu0 0
    %651 = vmatpush1.bf16.msra.mxu0 %v483
    %652 = vmatprep.mubr.bf16.mxu0 %v183
    %653 = vmatmul.mubr.bf16.gmra.mrb[0].mxu0 %v182
    %v654 = vpop.f32.mrb[0].mxu0
    %v655 = vadd.f32 %v615, %v654
    %v656 = vpop.f32.mrb[0].mxu0
    %v657 = vpop.f32.mrb[0].mxu0
    %v658 = vpop.f32.mrb[0].mxu0
    %659 = vdwg.mxu0
    %660 = vmatprep.subr.bf16.mxu0 0
    %661 = vmatpush1.bf16.msra.mxu0 %v484
    %662 = vmatprep.subr.bf16.mxu0 0
    %663 = vmatpush1.bf16.msra.mxu0 %v485
    %664 = vmatprep.subr.bf16.mxu0 0
    %665 = vmatpush1.bf16.msra.mxu0 %v486
    %666 = vmatprep.subr.bf16.mxu0 0
    %667 = vmatpush1.bf16.msra.mxu0 %v487
    %668 = vmatprep.subr.bf16.mxu0 0
    %669 = vmatpush1.bf16.msra.mxu0 %v488
    %670 = vmatprep.subr.bf16.mxu0 0
    %671 = vmatpush1.bf16.msra.mxu0 %v489
    %672 = vmatprep.subr.bf16.mxu0 0
    %673 = vmatpush1.bf16.msra.mxu0 %v490
    %674 = vmatprep.subr.bf16.mxu0 0
    %675 = vmatpush1.bf16.msra.mxu0 %v491
    %676 = vmatprep.subr.bf16.mxu0 0
    %677 = vmatpush1.bf16.msra.mxu0 %v492
    %678 = vmatprep.subr.bf16.mxu0 0
    %679 = vmatpush1.bf16.msra.mxu0 %v493
    %680 = vmatprep.subr.bf16.mxu0 0
    %681 = vmatpush1.bf16.msra.mxu0 %v494
    %682 = vmatprep.subr.bf16.mxu0 0
    %683 = vmatpush1.bf16.msra.mxu0 %v495
    %684 = vmatprep.subr.bf16.mxu0 0
    %685 = vmatpush1.bf16.msra.mxu0 %v496
    %686 = vmatprep.subr.bf16.mxu0 0
    %687 = vmatpush1.bf16.msra.mxu0 %v497
    %688 = vmatprep.subr.bf16.mxu0 0
    %689 = vmatpush1.bf16.msra.mxu0 %v498
    %690 = vmatprep.subr.bf16.mxu0 0
    %691 = vmatpush1.bf16.msra.mxu0 %v499
    %692 = vmatprep.mubr.bf16.mxu0 %v185
    %693 = vmatmul.mubr.bf16.gmra.mrb[0].mxu0 %v184
    %v694 = vpop.f32.mrb[0].mxu0
    %v695 = vadd.f32 %v655, %v694
    %v696 = vpop.f32.mrb[0].mxu0
    %v697 = vpop.f32.mrb[0].mxu0
    %v698 = vpop.f32.mrb[0].mxu0
    %699 = vdwg.mxu0
    %700 = vmatprep.subr.bf16.mxu0 0
    %701 = vmatpush1.bf16.msra.mxu0 %v500
    %702 = vmatprep.subr.bf16.mxu0 0
    %703 = vmatpush1.bf16.msra.mxu0 %v501
    %704 = vmatprep.subr.bf16.mxu0 0
    %705 = vmatpush1.bf16.msra.mxu0 %v502
    %706 = vmatprep.subr.bf16.mxu0 0
    %707 = vmatpush1.bf16.msra.mxu0 %v503
    %708 = vmatprep.subr.bf16.mxu0 0
    %709 = vmatpush1.bf16.msra.mxu0 %v504
    %710 = vmatprep.subr.bf16.mxu0 0
    %711 = vmatpush1.bf16.msra.mxu0 %v505
    %712 = vmatprep.subr.bf16.mxu0 0
    %713 = vmatpush1.bf16.msra.mxu0 %v506
    %714 = vmatprep.subr.bf16.mxu0 0
    %715 = vmatpush1.bf16.msra.mxu0 %v507
    %716 = vmatprep.subr.bf16.mxu0 0
    %717 = vmatpush1.bf16.msra.mxu0 %v508
    %718 = vmatprep.subr.bf16.mxu0 0
    %719 = vmatpush1.bf16.msra.mxu0 %v509
    %720 = vmatprep.subr.bf16.mxu0 0
    %721 = vmatpush1.bf16.msra.mxu0 %v510
    %722 = vmatprep.subr.bf16.mxu0 0
    %723 = vmatpush1.bf16.msra.mxu0 %v511
    %724 = vmatprep.subr.bf16.mxu0 0
    %725 = vmatpush1.bf16.msra.mxu0 %v512
    %726 = vmatprep.subr.bf16.mxu0 0
    %727 = vmatpush1.bf16.msra.mxu0 %v513
    %728 = vmatprep.subr.bf16.mxu0 0
    %729 = vmatpush1.bf16.msra.mxu0 %v514
    %730 = vmatprep.subr.bf16.mxu0 0
    %731 = vmatpush1.bf16.msra.mxu0 %v515
    %732 = vmatprep.mubr.bf16.mxu0 %v187
    %733 = vmatmul.mubr.bf16.gmra.mrb[0].mxu0 %v186
    %v734 = vpop.f32.mrb[0].mxu0
    %v735 = vadd.f32 %v695, %v734
    %v736 = vpop.f32.mrb[0].mxu0
    %v737 = vpop.f32.mrb[0].mxu0
    %v738 = vpop.f32.mrb[0].mxu0
    %739 = vdwg.mxu0
    %v740 = vmax.f32 %v735, 0.0
    %v741 = vpack.c.bf16 %v740, %v740
    %v742 = vld [vmem:[%s4] sm:$0xf]
    %v743 = vld [vmem:[%s4 + $0x4] sm:$0xf]
    %v744 = vld [vmem:[%s4 + $0x8] sm:$0xf]
    %v745 = vld [vmem:[%s4 + $0xc] sm:$0xf]
    %v746 = vld [vmem:[%s4 + $0x10] sm:$0xf]
    %vm747 = vcmask 64512
    %v749 = vsel %vm747, %v32, 0
    %vm751 = vcmask 1043456
    %v753 = vsel %vm751, %v746, 0
    %755 = vmatprep.subr.bf16.mxu0 0
    %756 = vmatpush1.bf16.msra.mxu0 %v753
    %757 = vmatprep.subr.bf16.mxu0 0
    %758 = vmatpush1.bf16.msra.mxu0 0
    %759 = vmatprep.subr.bf16.mxu0 0
    %760 = vmatpush1.bf16.msra.mxu0 0
    %761 = vmatprep.subr.bf16.mxu0 0
    %762 = vmatpush1.bf16.msra.mxu0 0
    %763 = vmatprep.subr.bf16.mxu0 0
    %764 = vmatpush1.bf16.msra.mxu0 0
    %765 = vmatprep.subr.bf16.mxu0 0
    %766 = vmatpush1.bf16.msra.mxu0 0
    %767 = vmatprep.subr.bf16.mxu0 0
    %768 = vmatpush1.bf16.msra.mxu0 0
    %769 = vmatprep.subr.bf16.mxu0 0
    %770 = vmatpush1.bf16.msra.mxu0 0
    %771 = vmatprep.subr.bf16.mxu0 0
    %772 = vmatpush1.bf16.msra.mxu0 0
    %773 = vmatprep.subr.bf16.mxu0 0
    %774 = vmatpush1.bf16.msra.mxu0 0
    %775 = vmatprep.subr.bf16.mxu0 0
    %776 = vmatpush1.bf16.msra.mxu0 0
    %777 = vmatprep.subr.bf16.mxu0 0
    %778 = vmatpush1.bf16.msra.mxu0 0
    %779 = vmatprep.subr.bf16.mxu0 0
    %780 = vmatpush1.bf16.msra.mxu0 0
    %781 = vmatprep.subr.bf16.mxu0 0
    %782 = vmatpush1.bf16.msra.mxu0 0
    %783 = vmatprep.subr.bf16.mxu0 0
    %784 = vmatpush1.bf16.msra.mxu0 0
    %785 = vmatprep.subr.bf16.mxu0 0
    %786 = vmatpush1.bf16.msra.mxu0 0
    %787 = vmatprep.mubr.bf16.mxu0 0
    %788 = vmatmul.mubr.bf16.gmra.mrb[0].mxu0 %v749
    %v789 = vpop.f32.mrb[0].mxu0
    %v790 = vadd.f32 0.0, %v789
    %v791 = vpop.f32.mrb[0].mxu0
    %v792 = vpop.f32.mrb[0].mxu0
    %v793 = vpop.f32.mrb[0].mxu0
    %794 = vdwg.mxu0
    %v799 = vunpack.c.l.b16 %v742
    %v800 = vunpack.c.l.b16 %v743
    %v801 = vunpack.c.l.b16 %v744
    %v802 = vunpack.c.l.b16 %v745
    %v803 = vpack.c.b16 %v800, %v799
    %v804 = vpack.c.b16 %v802, %v801
    %vm807 = vcmask 261120
    %v809 = vsel %vm807, %v741, 0
    %811 = vmatprep.subr.bf16.mxu0 0
    %812 = vmatpush1.bf16.msra.mxu0 %v803
    %813 = vmatprep.subr.bf16.mxu0 0
    %814 = vmatpush1.bf16.msra.mxu0 %v804
    %815 = vmatprep.subr.bf16.mxu0 0
    %816 = vmatpush1.bf16.msra.mxu0 0
    %817 = vmatprep.subr.bf16.mxu0 0
    %818 = vmatpush1.bf16.msra.mxu0 0
    %819 = vmatprep.subr.bf16.mxu0 0
    %820 = vmatpush1.bf16.msra.mxu0 0
    %821 = vmatprep.subr.bf16.mxu0 0
    %822 = vmatpush1.bf16.msra.mxu0 0
    %823 = vmatprep.subr.bf16.mxu0 0
    %824 = vmatpush1.bf16.msra.mxu0 0
    %825 = vmatprep.subr.bf16.mxu0 0
    %826 = vmatpush1.bf16.msra.mxu0 0
    %827 = vmatprep.subr.bf16.mxu0 0
    %828 = vmatpush1.bf16.msra.mxu0 0
    %829 = vmatprep.subr.bf16.mxu0 0
    %830 = vmatpush1.bf16.msra.mxu0 0
    %831 = vmatprep.subr.bf16.mxu0 0
    %832 = vmatpush1.bf16.msra.mxu0 0
    %833 = vmatprep.subr.bf16.mxu0 0
    %834 = vmatpush1.bf16.msra.mxu0 0
    %835 = vmatprep.subr.bf16.mxu0 0
    %836 = vmatpush1.bf16.msra.mxu0 0
    %837 = vmatprep.subr.bf16.mxu0 0
    %838 = vmatpush1.bf16.msra.mxu0 0
    %839 = vmatprep.subr.bf16.mxu0 0
    %840 = vmatpush1.bf16.msra.mxu0 0
    %841 = vmatprep.subr.bf16.mxu0 0
    %842 = vmatpush1.bf16.msra.mxu0 0
    %843 = vmatprep.mubr.bf16.mxu0 0
    %844 = vmatmul.mubr.bf16.gmra.mrb[0].mxu0 %v809
    %v845 = vpop.f32.mrb[0].mxu0
    %v846 = vadd.f32 %v790, %v845
    %v847 = vpop.f32.mrb[0].mxu0
    %v848 = vpop.f32.mrb[0].mxu0
    %v849 = vpop.f32.mrb[0].mxu0
    %850 = vdwg.mxu0
    %v851 = vld [vmem:[%s5] sm:$0x1]
    %v853 = vlaneseq
    %v854 = vshrl.u32 %v853, 7
    %v855 = vsub.s32 0, %v854
    %v856 = vrot.slane %v851, %v855
    %v858 = vadd.f32 %v846, %v856
    %v859 = vmax.f32 %v858, 0.0
    %vm860 = vcmp.ne.f32.partialorder %v858, %v858
    %v861 = vadd.f32 %v858, 0.0
    %v862 = vand.u32 2147483647, %v858
    %v863 = vsub.f32 0.0, %v862
    %v864 = vmul.f32 %v863, 1.442695
    %v865 = vpow.pop %v864
    %v866 = vadd.f32 %v865, 1.0
    %v867 = vlog2.pop %v866
    %v868 = vmul.f32 %v867, 0.6931472
    %v869 = vmul.f32 -0.5, %v865
    %v870 = vadd.f32 %v869, 1.0
    %v871 = vmul.f32 %v870, %v865
    %v872 = vand.u32 2147483647, %v865
    %vm873 = vcmp.lt.f32.partialorder %v872, 0.0004427343
    %v874 = vsel %vm873, %v871, %v868
    %v875 = vadd.f32 %v859, %v874
    %v876 = vsel %vm860, %v861, %v875
    %v877 = vadd.f32 %v876, 1e-07
    %v878 = vld [vmem:[%s6] sm:$0xff]
    %880 = vrot.lane.b32.xlu0 %v878, 16
    %v881 = vpop.permute.xlu0 %880
    %v883 = vmul.f32 %v877, %v881
    %885 = vrot.lane.b32.xlu0 %v883, 112
    %v886 = vpop.permute.xlu0 %885
    %v888 = vadd.f32 %v858, %v886
    %890 = vrot.lane.b32.xlu0 %v888, 32
    %v891 = vpop.permute.xlu0 %890
    %vm893 = vcmask 130048
    %v894 = vsel %vm893, %v858, %v877
    %v895 = vsel %vm807, %v894, %v891
    %vm896 = vcmask 392192
    %897 = vst.msk [vmem:[#allocation2] sm:$0xff] %vm896, %v895
    // Predicated region
    $region30: #{tpu_custom_call.1} parent=1 // pred_check
      _
    $region31: #{tpu_custom_call.1} parent=1 // pred_check_branch
      %899 = sbr.rel (0) target = $region33
    $region32: #{tpu_custom_call.1} parent=1 // pred_region
      %s901 = ssub.s32 128, 128
      %902 = vsyncadd [#allocation3], %s901
      %s904 = sshll.u32 [#allocation2], 4
      %s905 = int_to_ptr.vmem [resolvable:$true] %s904
      %907 = dma.vmem_to_hbm [thread:$0]  %s905, 128, %s7, [#allocation3]
    $region33: #{tpu_custom_call.1} parent=1 // pred_fallthru
      _
    // Predicated region
    $region34: #{tpu_custom_call.1} parent=1 // pred_check
      _
    $region35: #{tpu_custom_call.1} parent=1 // pred_check_branch
      %909 = sbr.rel (0) target = $region37
    $region36: #{tpu_custom_call.1} parent=1 // pred_region
      %910 = dma.done [#allocation3], 128
    $region37: #{tpu_custom_call.1} parent=1 // pred_fallthru
      _
    %911 = vsyncpa [#allocation3], 1

</llo_original>
